<compile_context>
chip_gen: v7x
topology: tpu7x:2x2x1
jax: 0.10.0
libtpu: 0.0.40
codegen_flags: <defaults>
</compile_context>

<pallas_src>
import jax
import jax.numpy as jnp
from jax.experimental import pallas as pl
from jax.experimental.pallas import tpu as pltpu

NEG_SLOPE = 0.01   # torch.nn.LeakyReLU default
BN_EPS = 1e-5      # torch.nn.BatchNorm1d default
GIN_EPS = 0.0      # torch_geometric GINConv default eps


def _leaky_relu(x):
    return jnp.where(x > 0, x, NEG_SLOPE * x)


def _round_up(x, m):
    return ((x + m - 1) // m) * m


def _pad2(a, rows, cols, dtype=None):
    """Zero-pad a 2-D array up to (rows, cols), optional dtype cast."""
    dtype = a.dtype if dtype is None else dtype
    out = jnp.zeros((rows, cols), dtype)
    return out.at[: a.shape[0], : a.shape[1]].set(a.astype(dtype))


def _pick_row_tile(np_):
    # Prefer >= 2 row tiles (v7x megacore sharding + DMA/compute overlap),
    # cap at 512 to bound per-step VMEM / per-step overhead trade-off.
    for c in (512, 384, 256, 128):
        if np_ % c == 0 and np_ // c >= 2:
            return c
    return 128  # np_ == 128 -> single tile


def _pick_k_tile(np_):
    for c in (512, 384, 256, 128):
        if np_ % c == 0:
            return c
    return np_


def _vmem_limit(est_bytes):
    # True upper bound on this kernel's footprint; comfortably below v7x's
    # 64 MiB physical VMEM because tiling is graph-size independent.
    return int(min(100 << 20, max(16 << 20, 4 * est_bytes)))


# ----------------------------------------------------------------------------
# One GINConv layer (BN pre-folded into linear 1), K-tiled aggregation:
#   agg(tile) = sum_k A[i, k] @ X[k]          (int8 A widened to bf16, f32 acc)
#   z = (1+eps)*x_i + agg ; h = leaky(leaky(z@W1'+b1')@W2+b2)   (on last k)
# grid = (row tiles [parallel], K tiles [arbitrary])
# ----------------------------------------------------------------------------
def _gin_layer_kernel(a_ref, xk_ref, xs_ref, w1_ref, b1_ref, w2_ref, b2_ref,
                      out_ref, acc_ref):
    k = pl.program_id(1)

    @pl.when(k == 0)
    def _():
        acc_ref[...] = jnp.zeros_like(acc_ref)

    # int8 -> f32 -> bf16 widen (VPU, hidden behind the halved A DMA).
    a_bf = a_ref[...].astype(jnp.float32).astype(jnp.bfloat16)
    acc_ref[...] += jnp.dot(a_bf, xk_ref[...],
                            preferred_element_type=jnp.float32)

    @pl.when(k == pl.num_programs(1) - 1)
    def _():
        z = (1.0 + GIN_EPS) * xs_ref[...].astype(jnp.float32) + acc_ref[...]
        y = jnp.dot(z.astype(jnp.bfloat16), w1_ref[...],
                    preferred_element_type=jnp.float32) + b1_ref[...]
        y = _leaky_relu(y)
        h = jnp.dot(y.astype(jnp.bfloat16), w2_ref[...],
                    preferred_element_type=jnp.float32) + b2_ref[...]
        out_ref[...] = _leaky_relu(h).astype(out_ref.dtype)


def gin_layer(A, X, p, *, tm, tk):
    np_, f_pad = X.shape
    h_pad = p["w2"].shape[1]
    n_row = np_ // tm
    n_k = np_ // tk

    est = (2 * tm * tk * 1                 # A int8 tile, double-buffered
           + 2 * tk * f_pad * 2            # X K-tile (bf16)
           + 2 * tm * f_pad * 2            # X self tile (bf16)
           + 2 * (f_pad * h_pad + h_pad * h_pad) * 2 + 2 * 2 * h_pad * 4
           + 2 * tm * h_pad * 2            # out tile (bf16)
           + tm * f_pad * 4)               # agg accumulator scratch

    flops = 2 * np_ * np_ * f_pad + 2 * np_ * (f_pad * h_pad + h_pad * h_pad)
    bytes_accessed = (np_ * np_ * 1                      # A (int8), read once
                      + n_row * np_ * f_pad * 2          # X K-tiles per row tile
                      + np_ * f_pad * 2                  # X self tiles
                      + (f_pad * h_pad + h_pad * h_pad) * 2 + 2 * h_pad * 4
                      + np_ * h_pad * 2)                 # output (bf16)

    return pl.pallas_call(
        _gin_layer_kernel,
        out_shape=jax.ShapeDtypeStruct((np_, h_pad), jnp.bfloat16),
        grid=(n_row, n_k),
        in_specs=[
            pl.BlockSpec((tm, tk), lambda i, k: (i, k)),        # A tile (int8)
            pl.BlockSpec((tk, f_pad), lambda i, k: (k, 0)),     # X K-tile (bf16)
            pl.BlockSpec((tm, f_pad), lambda i, k: (i, 0)),     # X self tile (bf16)
            pl.BlockSpec((f_pad, h_pad), lambda i, k: (0, 0)),  # W1 (BN folded, bf16)
            pl.BlockSpec((1, h_pad), lambda i, k: (0, 0)),      # b1 (f32)
            pl.BlockSpec((h_pad, h_pad), lambda i, k: (0, 0)),  # W2 (bf16)
            pl.BlockSpec((1, h_pad), lambda i, k: (0, 0)),      # b2 (f32)
        ],
        out_specs=pl.BlockSpec((tm, h_pad), lambda i, k: (i, 0)),
        scratch_shapes=[pltpu.VMEM((tm, f_pad), jnp.float32)],
        compiler_params=pltpu.CompilerParams(
            dimension_semantics=("parallel", "arbitrary"),
            vmem_limit_bytes=_vmem_limit(est)),
        cost_estimate=pl.CostEstimate(flops=flops, transcendentals=0,
                                      bytes_accessed=bytes_accessed),
    )(A, X, X, p["w1"], p["b1"], p["w2"], p["b2"])


# ----------------------------------------------------------------------------
# Readout head fused with pooling: stream bf16 node tiles once, accumulate
#   pooled_l += P[:, tile] @ h_l[tile]   (f32 VMEM scratch accumulators)
# then on the last tile: cat -> lin1 -> relu -> (dropout=id) -> lin2 -> leaky.
# cat((g1,g2,g3)) @ Wl1 == g1 @ Wl1[0:H] + g2 @ Wl1[H:2H] + g3 @ Wl1[2H:3H].
# ----------------------------------------------------------------------------
def _head_kernel(p_ref, h1_ref, h2_ref, h3_ref,
                 w11_ref, w12_ref, w13_ref, bl1_ref, wl2_ref, bl2_ref,
                 out_ref, g1_acc, g2_acc, g3_acc):
    i = pl.program_id(0)

    @pl.when(i == 0)
    def _():
        g1_acc[...] = jnp.zeros_like(g1_acc)
        g2_acc[...] = jnp.zeros_like(g2_acc)
        g3_acc[...] = jnp.zeros_like(g3_acc)

    p = p_ref[...]                                       # (G_pad, TM) bf16
    g1_acc[...] += jnp.dot(p, h1_ref[...], preferred_element_type=jnp.float32)
    g2_acc[...] += jnp.dot(p, h2_ref[...], preferred_element_type=jnp.float32)
    g3_acc[...] += jnp.dot(p, h3_ref[...], preferred_element_type=jnp.float32)

    @pl.when(i == pl.num_programs(0) - 1)
    def _():
        h = (jnp.dot(g1_acc[...].astype(jnp.bfloat16), w11_ref[...],
                     preferred_element_type=jnp.float32)
             + jnp.dot(g2_acc[...].astype(jnp.bfloat16), w12_ref[...],
                       preferred_element_type=jnp.float32)
             + jnp.dot(g3_acc[...].astype(jnp.bfloat16), w13_ref[...],
                       preferred_element_type=jnp.float32)
             + bl1_ref[...])
        h = jnp.maximum(h, 0.0)                          # relu
        # TODO(synk): F.dropout(p=0.5) only acts in training mode; eval forward => identity.
        o = jnp.dot(h.astype(jnp.bfloat16), wl2_ref[...],
                    preferred_element_type=jnp.float32) + bl2_ref[...]
        out_ref[...] = _leaky_relu(o)                    # activation=None branch


def head(P, h1, h2, h3, p, *, tm):
    g_pad, np_ = P.shape
    h_pad = h1.shape[1]
    h3_pad = p["bl1"].shape[1]
    c_pad = p["bl2"].shape[1]
    n_tiles = np_ // tm

    est = (2 * g_pad * tm * 2                    # P tile (bf16)
           + 3 * 2 * tm * h_pad * 2              # h1/h2/h3 tiles (bf16)
           + 2 * (3 * h_pad * h3_pad + h3_pad * c_pad) * 2
           + 2 * (h3_pad + c_pad) * 4
           + 2 * g_pad * c_pad * 4               # out
           + 3 * g_pad * h_pad * 4)              # accumulators

    flops = (3 * 2 * g_pad * np_ * h_pad
             + 3 * 2 * g_pad * h_pad * h3_pad
             + 2 * g_pad * h3_pad * c_pad)
    bytes_accessed = (g_pad * np_ * 2 + 3 * np_ * h_pad * 2
                      + (3 * h_pad * h3_pad + h3_pad * c_pad) * 2
                      + (h3_pad + c_pad) * 4
                      + g_pad * c_pad * 4)

    return pl.pallas_call(
        _head_kernel,
        out_shape=jax.ShapeDtypeStruct((g_pad, c_pad), jnp.float32),
        grid=(n_tiles,),
        in_specs=[
            pl.BlockSpec((g_pad, tm), lambda i: (0, i)),      # P column tile (bf16)
            pl.BlockSpec((tm, h_pad), lambda i: (i, 0)),      # h1 tile
            pl.BlockSpec((tm, h_pad), lambda i: (i, 0)),      # h2 tile
            pl.BlockSpec((tm, h_pad), lambda i: (i, 0)),      # h3 tile
            pl.BlockSpec((h_pad, h3_pad), lambda i: (0, 0)),  # Wl1[0:H]
            pl.BlockSpec((h_pad, h3_pad), lambda i: (0, 0)),  # Wl1[H:2H]
            pl.BlockSpec((h_pad, h3_pad), lambda i: (0, 0)),  # Wl1[2H:3H]
            pl.BlockSpec((1, h3_pad), lambda i: (0, 0)),      # bl1 (f32)
            pl.BlockSpec((h3_pad, c_pad), lambda i: (0, 0)),  # Wl2
            pl.BlockSpec((1, c_pad), lambda i: (0, 0)),       # bl2 (f32)
        ],
        out_specs=pl.BlockSpec((g_pad, c_pad), lambda i: (0, 0)),
        scratch_shapes=[pltpu.VMEM((g_pad, h_pad), jnp.float32)] * 3,
        compiler_params=pltpu.CompilerParams(
            dimension_semantics=("arbitrary",),   # pooling reduction over node tiles
            vmem_limit_bytes=_vmem_limit(est)),
        cost_estimate=pl.CostEstimate(flops=flops, transcendentals=0,
                                      bytes_accessed=bytes_accessed),
    )(P, h1, h2, h3, p["wl1_1"], p["wl1_2"], p["wl1_3"],
      p["bl1"], p["wl2"], p["bl2"])


# ----------------------------------------------------------------------------
# Host-side parameter prep: fold eval-mode BatchNorm into linear 1, zero-pad
# to 128-lane widths, cast matmul weights to bf16 (biases stay f32).
# ----------------------------------------------------------------------------
def _prep_layer(p, f_pad, h_pad):
    scale = p["gamma"] * jax.lax.rsqrt(p["running_var"] + BN_EPS)     # (1, H)
    w1f = p["w1"] * scale
    b1f = (p["b1"] - p["running_mean"]) * scale + p["beta"]
    return {
        "w1": _pad2(w1f, f_pad, h_pad, jnp.bfloat16),
        "b1": _pad2(b1f, 1, h_pad, jnp.float32),
        "w2": _pad2(p["w2"], h_pad, h_pad, jnp.bfloat16),
        "b2": _pad2(p["b2"], 1, h_pad, jnp.float32),
    }


def _prep_head(p, dim_h, h_pad, h3_pad, c_pad):
    wl1 = p["wl1"]                                       # (3H, 3H)
    return {
        "wl1_1": _pad2(wl1[0:dim_h, :], h_pad, h3_pad, jnp.bfloat16),
        "wl1_2": _pad2(wl1[dim_h:2 * dim_h, :], h_pad, h3_pad, jnp.bfloat16),
        "wl1_3": _pad2(wl1[2 * dim_h:3 * dim_h, :], h_pad, h3_pad, jnp.bfloat16),
        "bl1": _pad2(p["bl1"], 1, h3_pad, jnp.float32),
        "wl2": _pad2(p["wl2"], h3_pad, c_pad, jnp.bfloat16),
        "bl2": _pad2(p["bl2"], 1, c_pad, jnp.float32),
    }


# ----------------------------------------------------------------------------
# Full model
# ----------------------------------------------------------------------------
def gin_forward(x, x_e, edge_index, batch, params, num_graphs):
    # x_e (edge features) is accepted but unused, matching the reference forward.
    del x_e
    N, F = x.shape
    dim_h = params["conv1"]["w2"].shape[0]
    n_class = params["head"]["wl2"].shape[1]

    # Padded / tiled geometry (lane dim 128, sublane dim 8).  Node count is
    # padded only to 128 (A is N^2 and HBM-dominant, so padding to tm would
    # inflate the roofline term); tm divides Np and prefers >= 2 row tiles.
    np_ = _round_up(max(N, 128), 128)
    tm = _pick_row_tile(np_)
    tk = _pick_k_tile(np_)
    f_pad = _round_up(F, 128)
    h_pad = _round_up(dim_h, 128)
    h3_pad = _round_up(3 * dim_h, 128)
    c_pad = _round_up(n_class, 128)
    g_pad = _round_up(num_graphs, 8)

    # Dense adjacency A[i, j] = #edges j -> i (message x_j summed into node i),
    # stored int8 (multiplicities <= 127 exact); padded rows/cols are zero.
    A = jnp.zeros((np_, np_), jnp.int32)
    A = A.at[edge_index[1], edge_index[0]].add(1)
    A = A.astype(jnp.int8)

    Xp = _pad2(x, np_, f_pad, jnp.bfloat16)

    # One-hot pooling matrix P[g, n] = 1 if batch[n] == g (padded nodes -> no
    # graph); 0/1 values are exact in bf16.
    batch_p = jnp.full((np_,), -1, jnp.int32).at[:N].set(batch.astype(jnp.int32))
    P = (batch_p[None, :] == jnp.arange(g_pad, dtype=jnp.int32)[:, None]
         ).astype(jnp.bfloat16)

    l1 = _prep_layer(params["conv1"], f_pad, h_pad)
    l2 = _prep_layer(params["conv2"], h_pad, h_pad)
    l3 = _prep_layer(params["conv3"], h_pad, h_pad)
    hd = _prep_head(params["head"], dim_h, h_pad, h3_pad, c_pad)

    h1 = gin_layer(A, Xp, l1, tm=tm, tk=tk)
    h2 = gin_layer(A, h1, l2, tm=tm, tk=tk)
    h3 = gin_layer(A, h2, l3, tm=tm, tk=tk)

    out = head(P, h1, h2, h3, hd, tm=tm)
    return out[:num_graphs, :n_class]


# ----------------------------------------------------------------------------
# Deterministic parameter construction (unpadded, PyTorch-equivalent layout)
# ----------------------------------------------------------------------------
def make_gin_layer_params(key, dim_in, dim_h):
    k1, k2, k3, k4 = jax.random.split(key, 4)
    return {
        "w1": 0.1 * jax.random.normal(k1, (dim_in, dim_h), jnp.float32),
        "b1": 0.1 * jax.random.normal(k2, (1, dim_h), jnp.float32),
        # BatchNorm1d defaults: gamma=1, beta=0, running_mean=0, running_var=1
        "gamma": jnp.ones((1, dim_h), jnp.float32),
        "beta": jnp.zeros((1, dim_h), jnp.float32),
        "running_mean": jnp.zeros((1, dim_h), jnp.float32),
        "running_var": jnp.ones((1, dim_h), jnp.float32),
        "w2": 0.1 * jax.random.normal(k3, (dim_h, dim_h), jnp.float32),
        "b2": 0.1 * jax.random.normal(k4, (1, dim_h), jnp.float32),
    }


def make_params(key, dim_feats, dim_h, n_class):
    kc1, kc2, kc3, kh1, kh2, kh3, kh4 = jax.random.split(key, 7)
    return {
        "conv1": make_gin_layer_params(kc1, dim_feats, dim_h),
        "conv2": make_gin_layer_params(kc2, dim_h, dim_h),
        "conv3": make_gin_layer_params(kc3, dim_h, dim_h),
        "head": {
            "wl1": 0.1 * jax.random.normal(kh1, (dim_h * 3, dim_h * 3), jnp.float32),
            "bl1": 0.1 * jax.random.normal(kh2, (1, dim_h * 3), jnp.float32),
            "wl2": 0.1 * jax.random.normal(kh3, (dim_h * 3, n_class), jnp.float32),
            "bl2": 0.1 * jax.random.normal(kh4, (1, n_class), jnp.float32),
        },
    }


if __name__ == "__main__":
    dim_feats, dim_h, n_class = 16, 32, 4
    num_nodes, num_edges, num_graphs = 24, 48, 3

    key = jax.random.PRNGKey(0)
    kx, ke, kei, kp = jax.random.split(key, 4)

    x = jax.random.normal(kx, (num_nodes, dim_feats), jnp.float32)
    x_e = jax.random.normal(ke, (num_edges, 4), jnp.float32)   # unused by forward
    edge_index = jax.random.randint(kei, (2, num_edges), 0, num_nodes, jnp.int32)
    batch = jnp.repeat(jnp.arange(num_graphs, dtype=jnp.int32),
                       num_nodes // num_graphs)

    params = make_params(kp, dim_feats, dim_h, n_class)

    out = gin_forward(x, x_e, edge_index, batch, params, num_graphs)
    out = jax.block_until_ready(out)
    assert out.shape == (num_graphs, n_class)
    assert jnp.all(jnp.isfinite(out))
    print("KERNEL_OK")
</pallas_src>

<mosaic_0001>
module attributes {stable_mosaic.version = 11 : i64} {
  func.func @_gin_layer_kernel(%arg0: i32, %arg1: i32, %arg2: memref<128x128xi8, #tpu.memory_space<vmem>>, %arg3: memref<128x128xbf16, #tpu.memory_space<vmem>>, %arg4: memref<128x128xbf16, #tpu.memory_space<vmem>>, %arg5: memref<128x128xbf16, #tpu.memory_space<vmem>>, %arg6: memref<1x128xf32, #tpu.memory_space<vmem>>, %arg7: memref<128x128xbf16, #tpu.memory_space<vmem>>, %arg8: memref<1x128xf32, #tpu.memory_space<vmem>>, %arg9: memref<128x128xbf16, #tpu.memory_space<vmem>>, %arg10: memref<128x128xf32, #tpu.memory_space<vmem>>) attributes {dimension_semantics = [#tpu.dimension_semantics<parallel>, #tpu.dimension_semantics<arbitrary>], iteration_bounds = array<i64: 1, 1>, scalar_prefetch = 0 : i64, scratch_operands = 1 : i64, tpu.core_type = #tpu.core_type<tc>, window_params = [{transform_indices = @transform_0, window_bounds = array<i64: 128, 128>}, {transform_indices = @transform_1, window_bounds = array<i64: 128, 128>}, {transform_indices = @transform_2, window_bounds = array<i64: 128, 128>}, {pipeline_mode = #tpu.pipeline_mode<synchronous>, transform_indices = @transform_3, window_bounds = array<i64: 128, 128>}, {pipeline_mode = #tpu.pipeline_mode<synchronous>, transform_indices = @transform_4, window_bounds = array<i64: 1, 128>}, {pipeline_mode = #tpu.pipeline_mode<synchronous>, transform_indices = @transform_5, window_bounds = array<i64: 128, 128>}, {pipeline_mode = #tpu.pipeline_mode<synchronous>, transform_indices = @transform_6, window_bounds = array<i64: 1, 128>}, {transform_indices = @transform_7, window_bounds = array<i64: 128, 128>}]} {
    %c0_i32 = arith.constant 0 : i32
    %0 = arith.cmpi eq, %arg1, %c0_i32 : i32
    %1 = arith.extui %0 : i1 to i32
    %c0_i32_0 = arith.constant 0 : i32
    %2 = arith.cmpi ne, %1, %c0_i32_0 : i32
    scf.if %2 {
      %cst_10 = arith.constant 0.000000e+00 : f32
      %14 = vector.broadcast %cst_10 : f32 to vector<128x128xf32>
      %c0_11 = arith.constant 0 : index
      %c0_12 = arith.constant 0 : index
      %15 = vector.load %arg10[%c0_11, %c0_12] : memref<128x128xf32, #tpu.memory_space<vmem>>, vector<128x128xf32>
      tpu.vector_store %arg10[%c0_11, %c0_12], %14 {strides = array<i32>} : memref<128x128xf32, #tpu.memory_space<vmem>>, vector<128x128xf32>,
    } else {
    }
    %c0 = arith.constant 0 : index
    %c0_1 = arith.constant 0 : index
    %3 = vector.load %arg2[%c0, %c0_1] : memref<128x128xi8, #tpu.memory_space<vmem>>, vector<128x128xi8>
    %4 = arith.sitofp %3 : vector<128x128xi8> to vector<128x128xf32>
    %5 = arith.truncf %4 : vector<128x128xf32> to vector<128x128xbf16>
    %c0_2 = arith.constant 0 : index
    %c0_3 = arith.constant 0 : index
    %6 = vector.load %arg10[%c0_2, %c0_3] : memref<128x128xf32, #tpu.memory_space<vmem>>, vector<128x128xf32>
    %c0_4 = arith.constant 0 : index
    %c0_5 = arith.constant 0 : index
    %7 = vector.load %arg3[%c0_4, %c0_5] : memref<128x128xbf16, #tpu.memory_space<vmem>>, vector<128x128xbf16>
    %cst = arith.constant dense<0.000000e+00> : vector<128x128xf32>
    %8 = tpu.matmul %5, %7, %cst {dimension_numbers = #tpu.dot_dimension_numbers<[1], [0], [0], [1], [0, 0, 1, 1], [], []>} : vector<128x128xbf16>, vector<128x128xbf16>, vector<128x128xf32> -> vector<128x128xf32>
    %9 = arith.addf %6, %8 : vector<128x128xf32>
    %c0_6 = arith.constant 0 : index
    %c0_7 = arith.constant 0 : index
    %10 = vector.load %arg10[%c0_6, %c0_7] : memref<128x128xf32, #tpu.memory_space<vmem>>, vector<128x128xf32>
    tpu.vector_store %arg10[%c0_6, %c0_7], %9 {strides = array<i32>} : memref<128x128xf32, #tpu.memory_space<vmem>>, vector<128x128xf32>,
    %c0_i32_8 = arith.constant 0 : i32
    %11 = arith.cmpi eq, %arg1, %c0_i32_8 : i32
    %12 = arith.extui %11 : i1 to i32
    %c0_i32_9 = arith.constant 0 : i32
    %13 = arith.cmpi ne, %12, %c0_i32_9 : i32
    scf.if %13 {
      %c0_10 = arith.constant 0 : index
      %c0_11 = arith.constant 0 : index
      %14 = vector.load %arg4[%c0_10, %c0_11] : memref<128x128xbf16, #tpu.memory_space<vmem>>, vector<128x128xbf16>
      %15 = arith.extf %14 : vector<128x128xbf16> to vector<128x128xf32>
      %cst_12 = arith.constant 1.000000e+00 : f32
      %16 = vector.broadcast %cst_12 : f32 to vector<128x128xf32>
      %17 = arith.mulf %16, %15 : vector<128x128xf32>
      %c0_13 = arith.constant 0 : index
      %c0_14 = arith.constant 0 : index
      %18 = vector.load %arg10[%c0_13, %c0_14] : memref<128x128xf32, #tpu.memory_space<vmem>>, vector<128x128xf32>
      %19 = arith.addf %17, %18 : vector<128x128xf32>
      %20 = arith.truncf %19 : vector<128x128xf32> to vector<128x128xbf16>
      %c0_15 = arith.constant 0 : index
      %c0_16 = arith.constant 0 : index
      %21 = vector.load %arg5[%c0_15, %c0_16] : memref<128x128xbf16, #tpu.memory_space<vmem>>, vector<128x128xbf16>
      %cst_17 = arith.constant dense<0.000000e+00> : vector<128x128xf32>
      %22 = tpu.matmul %20, %21, %cst_17 {dimension_numbers = #tpu.dot_dimension_numbers<[1], [0], [0], [1], [0, 0, 1, 1], [], []>} : vector<128x128xbf16>, vector<128x128xbf16>, vector<128x128xf32> -> vector<128x128xf32>
      %c0_18 = arith.constant 0 : index
      %c0_19 = arith.constant 0 : index
      %23 = vector.load %arg6[%c0_18, %c0_19] : memref<1x128xf32, #tpu.memory_space<vmem>>, vector<1x128xf32>
      %24 = vector.broadcast %23 : vector<1x128xf32> to vector<128x128xf32>
      %25 = arith.addf %22, %24 : vector<128x128xf32>
      %cst_20 = arith.constant 0.000000e+00 : f32
      %26 = vector.broadcast %cst_20 : f32 to vector<128x128xf32>
      %27 = arith.cmpf ogt, %25, %26 : vector<128x128xf32>
      %cst_21 = arith.constant 0.00999999977 : f32
      %28 = vector.broadcast %cst_21 : f32 to vector<128x128xf32>
      %29 = arith.mulf %28, %25 : vector<128x128xf32>
      %30 = arith.select %27, %25, %29 : vector<128x128xi1>, vector<128x128xf32>
      %31 = arith.truncf %30 : vector<128x128xf32> to vector<128x128xbf16>
      %c0_22 = arith.constant 0 : index
      %c0_23 = arith.constant 0 : index
      %32 = vector.load %arg7[%c0_22, %c0_23] : memref<128x128xbf16, #tpu.memory_space<vmem>>, vector<128x128xbf16>
      %cst_24 = arith.constant dense<0.000000e+00> : vector<128x128xf32>
      %33 = tpu.matmul %31, %32, %cst_24 {dimension_numbers = #tpu.dot_dimension_numbers<[1], [0], [0], [1], [0, 0, 1, 1], [], []>} : vector<128x128xbf16>, vector<128x128xbf16>, vector<128x128xf32> -> vector<128x128xf32>
      %c0_25 = arith.constant 0 : index
      %c0_26 = arith.constant 0 : index
      %34 = vector.load %arg8[%c0_25, %c0_26] : memref<1x128xf32, #tpu.memory_space<vmem>>, vector<1x128xf32>
      %35 = vector.broadcast %34 : vector<1x128xf32> to vector<128x128xf32>
      %36 = arith.addf %33, %35 : vector<128x128xf32>
      %cst_27 = arith.constant 0.000000e+00 : f32
      %37 = vector.broadcast %cst_27 : f32 to vector<128x128xf32>
      %38 = arith.cmpf ogt, %36, %37 : vector<128x128xf32>
      %cst_28 = arith.constant 0.00999999977 : f32
      %39 = vector.broadcast %cst_28 : f32 to vector<128x128xf32>
      %40 = arith.mulf %39, %36 : vector<128x128xf32>
      %41 = arith.select %38, %36, %40 : vector<128x128xi1>, vector<128x128xf32>
      %42 = arith.truncf %41 : vector<128x128xf32> to vector<128x128xbf16>
      %c0_29 = arith.constant 0 : index
      %c0_30 = arith.constant 0 : index
      %43 = vector.load %arg9[%c0_29, %c0_30] : memref<128x128xbf16, #tpu.memory_space<vmem>>, vector<128x128xbf16>
      tpu.vector_store %arg9[%c0_29, %c0_30], %42 {strides = array<i32>} : memref<128x128xbf16, #tpu.memory_space<vmem>>, vector<128x128xbf16>,
    } else {
    }
    return
  }
  func.func @transform_0(%arg0: i32, %arg1: i32) -> (i32, i32) {
    %c0_i32 = arith.constant 0 : i32
    return %arg0, %arg1 : i32, i32
  }
  func.func @transform_1(%arg0: i32, %arg1: i32) -> (i32, i32) {
    %c0_i32 = arith.constant 0 : i32
    %c0_i32_0 = arith.constant 0 : i32
    return %arg1, %c0_i32 : i32, i32
  }
  func.func @transform_2(%arg0: i32, %arg1: i32) -> (i32, i32) {
    %c0_i32 = arith.constant 0 : i32
    %c0_i32_0 = arith.constant 0 : i32
    return %arg0, %c0_i32 : i32, i32
  }
  func.func @transform_3(%arg0: i32, %arg1: i32) -> (i32, i32) {
    %c0_i32 = arith.constant 0 : i32
    %c0_i32_0 = arith.constant 0 : i32
    %c0_i32_1 = arith.constant 0 : i32
    return %c0_i32, %c0_i32_0 : i32, i32
  }
  func.func @transform_4(%arg0: i32, %arg1: i32) -> (i32, i32) {
    %c0_i32 = arith.constant 0 : i32
    %c0_i32_0 = arith.constant 0 : i32
    %c0_i32_1 = arith.constant 0 : i32
    return %c0_i32, %c0_i32_0 : i32, i32
  }
  func.func @transform_5(%arg0: i32, %arg1: i32) -> (i32, i32) {
    %c0_i32 = arith.constant 0 : i32
    %c0_i32_0 = arith.constant 0 : i32
    %c0_i32_1 = arith.constant 0 : i32
    return %c0_i32, %c0_i32_0 : i32, i32
  }
  func.func @transform_6(%arg0: i32, %arg1: i32) -> (i32, i32) {
    %c0_i32 = arith.constant 0 : i32
    %c0_i32_0 = arith.constant 0 : i32
    %c0_i32_1 = arith.constant 0 : i32
    return %c0_i32, %c0_i32_0 : i32, i32
  }
  func.func @transform_7(%arg0: i32, %arg1: i32) -> (i32, i32) {
    %c0_i32 = arith.constant 0 : i32
    %c0_i32_0 = arith.constant 0 : i32
    return %arg0, %c0_i32 : i32, i32
  }
}

</mosaic_0001>

<llo_original>
// kernel: tpu_custom_call.1
$region0: #{tpu_custom_call.1}
  #allocation0 [shape = 'u32[]', space=smem, size = 0x4, offset = 0x4, fixed_abs, tag = 'smem constant byte address 0x4 - core index']
  #allocation1 [shape = 'u32[144,128]{1,0:T(1,128)}', space=vmem, size = 0x12000, scoped, tag = 'internal scratch']
  #allocation2 [shape = 'f32[128,128]{1,0:T(8,128)}', space=vmem, size = 0x10000, scoped, tag = 'scratch operand']
  %s0 = inlined_call_operand.hbm [shape: s8[128,128], index: 0, kind: input, shape index: {}]
  %s1 = inlined_call_operand.hbm [shape: bf16[128,128], index: 1, kind: input, shape index: {}]
  %s2 = inlined_call_operand.hbm [shape: bf16[128,128], index: 2, kind: input, shape index: {}]
  %s3 = inlined_call_operand.hbm [shape: bf16[128,128], index: 3, kind: input, shape index: {}]
  %s4 = inlined_call_operand.vmem [shape: f32[1,128], index: 4, kind: input, shape index: {}]
  %s5 = inlined_call_operand.hbm [shape: bf16[128,128], index: 5, kind: input, shape index: {}]
  %s6 = inlined_call_operand.vmem [shape: f32[1,128], index: 6, kind: input, shape index: {}]
  %s7 = inlined_call_operand.hbm [shape: bf16[128,128], index: 7, kind: output, shape index: {}]
  %s8 = sld [smem:[#allocation0]]
  $region66: #{tpu_custom_call.1} parent=0
    _
  %s10 = ssub.s32 1, %s8
  %s11 = scalar_select 0, %s10, %s8
  $region1: #{tpu_custom_call.1} parent=0
    #allocation3 [shape = 'u8[16384]{0}', space=vmem, size = 0x4000, scoped, tag = 'input window, operand 0, single buffered']
    #allocation4 [shape = 's32[1]{0}', space=sflag, size = 0x4, scoped, tag = 'scoped memory for tpu_custom_call.1']
    #allocation5 [shape = 's32[1]{0}', space=sflag, size = 0x4, scoped, tag = 'scoped memory for tpu_custom_call.1']
    #allocation6 [shape = 'u8[32768]{0}', space=vmem, size = 0x8000, scoped, tag = 'input window, operand 1, single buffered']
    #allocation7 [shape = 's32[1]{0}', space=sflag, size = 0x4, scoped, tag = 'scoped memory for tpu_custom_call.1']
    #allocation8 [shape = 'u8[32768]{0}', space=vmem, size = 0x8000, scoped, tag = 'input window, operand 2, single buffered']
    #allocation9 [shape = 'u8[32768]{0}', space=vmem, size = 0x8000, scoped, tag = 'input window, operand 3, single buffered']
    #allocation10 [shape = 's32[1]{0}', space=sflag, size = 0x4, scoped, tag = 'scoped memory for tpu_custom_call.1']
    #allocation11 [shape = 'u8[32768]{0}', space=vmem, size = 0x8000, scoped, tag = 'input window, operand 5, single buffered']
    #allocation12 [shape = 'u8[32768]{0}', space=vmem, size = 0x8000, scoped, tag = 'output window, operand 0, single buffered']
    %12 = vsyncpa [#allocation4], 0
    %13 = vsyncpa [#allocation7], 0
    %14 = vsyncpa [#allocation10], 0
    %15 = vsyncpa [#allocation5], 0
    // Predicated region
    $region2: #{tpu_custom_call.1} parent=1 // pred_check
      _
    $region3: #{tpu_custom_call.1} parent=1 // pred_check_branch
      %17 = sbr.rel (0) target = $region5
    $region4: #{tpu_custom_call.1} parent=1 // pred_region
      %s19 = ssub.s32 512, 512
      %20 = vsyncadd [#allocation4], %s19
      %s21 = sshll.u32 [#allocation3], 4
      %s22 = int_to_ptr.vmem [resolvable:$true] %s21
      %27 = dma.hbm_to_vmem [thread:$0]  %s0, 512, %s22, [#allocation4], 128, 128, 8
    $region5: #{tpu_custom_call.1} parent=1 // pred_fallthru
      _
    // Predicated region
    $region6: #{tpu_custom_call.1} parent=1 // pred_check
      _
    $region7: #{tpu_custom_call.1} parent=1 // pred_check_branch
      %29 = sbr.rel (0) target = $region9
    $region8: #{tpu_custom_call.1} parent=1 // pred_region
      %s31 = ssub.s32 1024, 1024
      %32 = vsyncadd [#allocation7], %s31
      %s33 = sshll.u32 [#allocation6], 4
      %s34 = int_to_ptr.vmem [resolvable:$true] %s33
      %39 = dma.hbm_to_vmem [thread:$0]  %s1, 1024, %s34, [#allocation7], 64, 64, 4
    $region9: #{tpu_custom_call.1} parent=1 // pred_fallthru
      _
    // Predicated region
    $region10: #{tpu_custom_call.1} parent=1 // pred_check
      _
    $region11: #{tpu_custom_call.1} parent=1 // pred_check_branch
      %41 = sbr.rel (0) target = $region13
    $region12: #{tpu_custom_call.1} parent=1 // pred_region
      %s43 = ssub.s32 1024, 1024
      %44 = vsyncadd [#allocation7], %s43
      %s45 = sshll.u32 [#allocation8], 4
      %s46 = int_to_ptr.vmem [resolvable:$true] %s45
      %51 = dma.hbm_to_vmem [thread:$0]  %s2, 1024, %s46, [#allocation7], 64, 64, 4
    $region13: #{tpu_custom_call.1} parent=1 // pred_fallthru
      _
    // Predicated region
    $region14: #{tpu_custom_call.1} parent=1 // pred_check
      _
    $region15: #{tpu_custom_call.1} parent=1 // pred_check_branch
      %53 = sbr.rel (0) target = $region17
    $region16: #{tpu_custom_call.1} parent=1 // pred_region
      %s55 = ssub.s32 1024, 1024
      %56 = vsyncadd [#allocation10], %s55
      %s57 = sshll.u32 [#allocation9], 4
      %s58 = int_to_ptr.vmem [resolvable:$true] %s57
      %63 = dma.hbm_to_vmem [thread:$0]  %s3, 1024, %s58, [#allocation10], 64, 64, 4
    $region17: #{tpu_custom_call.1} parent=1 // pred_fallthru
      _
    // Predicated region
    $region18: #{tpu_custom_call.1} parent=1 // pred_check
      _
    $region19: #{tpu_custom_call.1} parent=1 // pred_check_branch
      %65 = sbr.rel (0) target = $region21
    $region20: #{tpu_custom_call.1} parent=1 // pred_region
      _
    $region21: #{tpu_custom_call.1} parent=1 // pred_fallthru
      _
    // Predicated region
    $region22: #{tpu_custom_call.1} parent=1 // pred_check
      _
    $region23: #{tpu_custom_call.1} parent=1 // pred_check_branch
      %67 = sbr.rel (0) target = $region25
    $region24: #{tpu_custom_call.1} parent=1 // pred_region
      %s69 = ssub.s32 1024, 1024
      %70 = vsyncadd [#allocation10], %s69
      %s71 = sshll.u32 [#allocation11], 4
      %s72 = int_to_ptr.vmem [resolvable:$true] %s71
      %77 = dma.hbm_to_vmem [thread:$0]  %s5, 1024, %s72, [#allocation10], 64, 64, 4
    $region25: #{tpu_custom_call.1} parent=1 // pred_fallthru
      _
    // Predicated region
    $region26: #{tpu_custom_call.1} parent=1 // pred_check
      _
    $region27: #{tpu_custom_call.1} parent=1 // pred_check_branch
      %79 = sbr.rel (0) target = $region29
    $region28: #{tpu_custom_call.1} parent=1 // pred_region
      _
    $region29: #{tpu_custom_call.1} parent=1 // pred_fallthru
      _
    // Predicated region
    $region30: #{tpu_custom_call.1} parent=1 // pred_check
      _
    $region31: #{tpu_custom_call.1} parent=1 // pred_check_branch
      %81 = sbr.rel (0) target = $region33
    $region32: #{tpu_custom_call.1} parent=1 // pred_region
      %82 = dma.done [#allocation4], 512
    $region33: #{tpu_custom_call.1} parent=1 // pred_fallthru
      _
    // Predicated region
    $region34: #{tpu_custom_call.1} parent=1 // pred_check
      _
    $region35: #{tpu_custom_call.1} parent=1 // pred_check_branch
      %84 = sbr.rel (0) target = $region37
    $region36: #{tpu_custom_call.1} parent=1 // pred_region
      %85 = dma.done [#allocation7], 1024
    $region37: #{tpu_custom_call.1} parent=1 // pred_fallthru
      _
    // Predicated region
    $region38: #{tpu_custom_call.1} parent=1 // pred_check
      _
    $region39: #{tpu_custom_call.1} parent=1 // pred_check_branch
      %87 = sbr.rel (0) target = $region41
    $region40: #{tpu_custom_call.1} parent=1 // pred_region
      %88 = dma.done [#allocation7], 1024
    $region41: #{tpu_custom_call.1} parent=1 // pred_fallthru
      _
    // Predicated region
    $region42: #{tpu_custom_call.1} parent=1 // pred_check
      _
    $region43: #{tpu_custom_call.1} parent=1 // pred_check_branch
      %90 = sbr.rel (0) target = $region45
    $region44: #{tpu_custom_call.1} parent=1 // pred_region
      %91 = dma.done [#allocation10], 1024
    $region45: #{tpu_custom_call.1} parent=1 // pred_fallthru
      _
    // Predicated region
    $region46: #{tpu_custom_call.1} parent=1 // pred_check
      _
    $region47: #{tpu_custom_call.1} parent=1 // pred_check_branch
      %93 = sbr.rel (0) target = $region49
    $region48: #{tpu_custom_call.1} parent=1 // pred_region
      %94 = dma.done [#allocation10], 1024
    $region49: #{tpu_custom_call.1} parent=1 // pred_fallthru
      _
    %p96 = scmp.eq.s32.totalorder 0, 0
    // Predicated region
    $region50: #{tpu_custom_call.1} parent=1 // pred_check
      %p97 = pneg %p96
    $region51: #{tpu_custom_call.1} parent=1 // pred_check_branch
      %99 = sbr.rel (%p97) target = $region53
    $region52: #{tpu_custom_call.1} parent=1 // pred_region
      %100 = vst [vmem:[#allocation2] sm:$0xff] 0.0
      %101 = vst [vmem:[#allocation2 + $0x8] sm:$0xff] 0.0
      %102 = vst [vmem:[#allocation2 + $0x10] sm:$0xff] 0.0
      %103 = vst [vmem:[#allocation2 + $0x18] sm:$0xff] 0.0
      %104 = vst [vmem:[#allocation2 + $0x20] sm:$0xff] 0.0
      %105 = vst [vmem:[#allocation2 + $0x28] sm:$0xff] 0.0
      %106 = vst [vmem:[#allocation2 + $0x30] sm:$0xff] 0.0
      %107 = vst [vmem:[#allocation2 + $0x38] sm:$0xff] 0.0
      %108 = vst [vmem:[#allocation2 + $0x40] sm:$0xff] 0.0
      %109 = vst [vmem:[#allocation2 + $0x48] sm:$0xff] 0.0
      %110 = vst [vmem:[#allocation2 + $0x50] sm:$0xff] 0.0
      %111 = vst [vmem:[#allocation2 + $0x58] sm:$0xff] 0.0
      %112 = vst [vmem:[#allocation2 + $0x60] sm:$0xff] 0.0
      %113 = vst [vmem:[#allocation2 + $0x68] sm:$0xff] 0.0
      %114 = vst [vmem:[#allocation2 + $0x70] sm:$0xff] 0.0
      %115 = vst [vmem:[#allocation2 + $0x78] sm:$0xff] 0.0
    $region53: #{tpu_custom_call.1} parent=1 // pred_fallthru
      _
    %v116 = vld [vmem:[#allocation3] sm:$0xff]
    %v117 = vld [vmem:[#allocation3 + $0x8] sm:$0xff]
    %v118 = vld [vmem:[#allocation3 + $0x10] sm:$0xff]
    %v119 = vld [vmem:[#allocation3 + $0x18] sm:$0xff]
    %v120 = vunpack.c.l.s8.bf16 %v116
    %v121 = vunpack.c.h.s8.bf16 %v116
    %v122 = vunpack.c.l.s8.bf16 %v117
    %v123 = vunpack.c.h.s8.bf16 %v117
    %v124 = vunpack.c.l.s8.bf16 %v118
    %v125 = vunpack.c.h.s8.bf16 %v118
    %v126 = vunpack.c.l.s8.bf16 %v119
    %v127 = vunpack.c.h.s8.bf16 %v119
    %v128 = vld [vmem:[#allocation2] sm:$0xff]
    %v129 = vld [vmem:[#allocation2 + $0x8] sm:$0xff]
    %v130 = vld [vmem:[#allocation2 + $0x10] sm:$0xff]
    %v131 = vld [vmem:[#allocation2 + $0x18] sm:$0xff]
    %v132 = vld [vmem:[#allocation2 + $0x20] sm:$0xff]
    %v133 = vld [vmem:[#allocation2 + $0x28] sm:$0xff]
    %v134 = vld [vmem:[#allocation2 + $0x30] sm:$0xff]
    %v135 = vld [vmem:[#allocation2 + $0x38] sm:$0xff]
    %v136 = vld [vmem:[#allocation2 + $0x40] sm:$0xff]
    %v137 = vld [vmem:[#allocation2 + $0x48] sm:$0xff]
    %v138 = vld [vmem:[#allocation2 + $0x50] sm:$0xff]
    %v139 = vld [vmem:[#allocation2 + $0x58] sm:$0xff]
    %v140 = vld [vmem:[#allocation2 + $0x60] sm:$0xff]
    %v141 = vld [vmem:[#allocation2 + $0x68] sm:$0xff]
    %v142 = vld [vmem:[#allocation2 + $0x70] sm:$0xff]
    %v143 = vld [vmem:[#allocation2 + $0x78] sm:$0xff]
    %v144 = vld [vmem:[#allocation6] sm:$0xf]
    %v145 = vld [vmem:[#allocation6 + $0x4] sm:$0xf]
    %v146 = vld [vmem:[#allocation6 + $0x8] sm:$0xf]
    %v147 = vld [vmem:[#allocation6 + $0xc] sm:$0xf]
    %v148 = vld [vmem:[#allocation6 + $0x10] sm:$0xf]
    %v149 = vld [vmem:[#allocation6 + $0x14] sm:$0xf]
    %v150 = vld [vmem:[#allocation6 + $0x18] sm:$0xf]
    %v151 = vld [vmem:[#allocation6 + $0x1c] sm:$0xf]
    %v152 = vld [vmem:[#allocation6 + $0x20] sm:$0xf]
    %v153 = vld [vmem:[#allocation6 + $0x24] sm:$0xf]
    %v154 = vld [vmem:[#allocation6 + $0x28] sm:$0xf]
    %v155 = vld [vmem:[#allocation6 + $0x2c] sm:$0xf]
    %v156 = vld [vmem:[#allocation6 + $0x30] sm:$0xf]
    %v157 = vld [vmem:[#allocation6 + $0x34] sm:$0xf]
    %v158 = vld [vmem:[#allocation6 + $0x38] sm:$0xf]
    %v159 = vld [vmem:[#allocation6 + $0x3c] sm:$0xf]
    %v176 = vunpack.c.l.b16 %v144
    %v177 = vunpack.c.l.b16 %v145
    %v178 = vunpack.c.l.b16 %v146
    %v179 = vunpack.c.l.b16 %v147
    %v180 = vunpack.c.l.b16 %v148
    %v181 = vunpack.c.l.b16 %v149
    %v182 = vunpack.c.l.b16 %v150
    %v183 = vunpack.c.l.b16 %v151
    %v184 = vunpack.c.l.b16 %v152
    %v185 = vunpack.c.l.b16 %v153
    %v186 = vunpack.c.l.b16 %v154
    %v187 = vunpack.c.l.b16 %v155
    %v188 = vunpack.c.l.b16 %v156
    %v189 = vunpack.c.l.b16 %v157
    %v190 = vunpack.c.l.b16 %v158
    %v191 = vunpack.c.l.b16 %v159
    %v192 = vpack.c.b16 %v177, %v176
    %v193 = vpack.c.b16 %v179, %v178
    %v194 = vpack.c.b16 %v181, %v180
    %v195 = vpack.c.b16 %v183, %v182
    %v196 = vpack.c.b16 %v185, %v184
    %v197 = vpack.c.b16 %v187, %v186
    %v198 = vpack.c.b16 %v189, %v188
    %v199 = vpack.c.b16 %v191, %v190
    %208 = vmatprep.subr.bf16.mxu0 0
    %209 = vmatpush1.bf16.msra.mxu0 %v192
    %210 = vmatprep.subr.bf16.mxu0 0
    %211 = vmatpush1.bf16.msra.mxu0 %v193
    %212 = vmatprep.subr.bf16.mxu0 0
    %213 = vmatpush1.bf16.msra.mxu0 %v194
    %214 = vmatprep.subr.bf16.mxu0 0
    %215 = vmatpush1.bf16.msra.mxu0 %v195
    %216 = vmatprep.subr.bf16.mxu0 0
    %217 = vmatpush1.bf16.msra.mxu0 %v196
    %218 = vmatprep.subr.bf16.mxu0 0
    %219 = vmatpush1.bf16.msra.mxu0 %v197
    %220 = vmatprep.subr.bf16.mxu0 0
    %221 = vmatpush1.bf16.msra.mxu0 %v198
    %222 = vmatprep.subr.bf16.mxu0 0
    %223 = vmatpush1.bf16.msra.mxu0 %v199
    %224 = vmatprep.subr.bf16.mxu0 0
    %225 = vmatpush1.bf16.msra.mxu0 0
    %226 = vmatprep.subr.bf16.mxu0 0
    %227 = vmatpush1.bf16.msra.mxu0 0
    %228 = vmatprep.subr.bf16.mxu0 0
    %229 = vmatpush1.bf16.msra.mxu0 0
    %230 = vmatprep.subr.bf16.mxu0 0
    %231 = vmatpush1.bf16.msra.mxu0 0
    %232 = vmatprep.subr.bf16.mxu0 0
    %233 = vmatpush1.bf16.msra.mxu0 0
    %234 = vmatprep.subr.bf16.mxu0 0
    %235 = vmatpush1.bf16.msra.mxu0 0
    %236 = vmatprep.subr.bf16.mxu0 0
    %237 = vmatpush1.bf16.msra.mxu0 0
    %238 = vmatprep.subr.bf16.mxu0 0
    %239 = vmatpush1.bf16.msra.mxu0 0
    %240 = vmatprep.mubr.bf16.mxu0 0
    %241 = vmatmul.mubr.bf16.gmra.mrb[0].mxu0 %v120
    %v242 = vpop.f32.mrb[0].mxu0
    %v243 = vadd.f32 0.0, %v242
    %v244 = vpop.f32.mrb[0].mxu0
    %v245 = vpop.f32.mrb[0].mxu0
    %v246 = vadd.f32 0.0, %v245
    %v247 = vpop.f32.mrb[0].mxu0
    %248 = vmatprep.mubr.bf16.mxu0 0
    %249 = vmatmul.mubr.bf16.gmra.mrb[0].mxu0 %v121
    %v250 = vpop.f32.mrb[0].mxu0
    %v251 = vadd.f32 0.0, %v250
    %v252 = vpop.f32.mrb[0].mxu0
    %v253 = vpop.f32.mrb[0].mxu0
    %v254 = vadd.f32 0.0, %v253
    %v255 = vpop.f32.mrb[0].mxu0
    %256 = vmatprep.mubr.bf16.mxu0 0
    %257 = vmatmul.mubr.bf16.gmra.mrb[0].mxu0 %v122
    %v258 = vpop.f32.mrb[0].mxu0
    %v259 = vadd.f32 0.0, %v258
    %v260 = vpop.f32.mrb[0].mxu0
    %v261 = vpop.f32.mrb[0].mxu0
    %v262 = vadd.f32 0.0, %v261
    %v263 = vpop.f32.mrb[0].mxu0
    %264 = vmatprep.mubr.bf16.mxu0 0
    %265 = vmatmul.mubr.bf16.gmra.mrb[0].mxu0 %v123
    %v266 = vpop.f32.mrb[0].mxu0
    %v267 = vadd.f32 0.0, %v266
    %v268 = vpop.f32.mrb[0].mxu0
    %v269 = vpop.f32.mrb[0].mxu0
    %v270 = vadd.f32 0.0, %v269
    %v271 = vpop.f32.mrb[0].mxu0
    %272 = vmatprep.mubr.bf16.mxu0 0
    %273 = vmatmul.mubr.bf16.gmra.mrb[0].mxu0 %v124
    %v274 = vpop.f32.mrb[0].mxu0
    %v275 = vadd.f32 0.0, %v274
    %v276 = vpop.f32.mrb[0].mxu0
    %v277 = vpop.f32.mrb[0].mxu0
    %v278 = vadd.f32 0.0, %v277
    %v279 = vpop.f32.mrb[0].mxu0
    %280 = vmatprep.mubr.bf16.mxu0 0
    %281 = vmatmul.mubr.bf16.gmra.mrb[0].mxu0 %v125
    %v282 = vpop.f32.mrb[0].mxu0
    %v283 = vadd.f32 0.0, %v282
    %v284 = vpop.f32.mrb[0].mxu0
    %v285 = vpop.f32.mrb[0].mxu0
    %v286 = vadd.f32 0.0, %v285
    %v287 = vpop.f32.mrb[0].mxu0
    %288 = vmatprep.mubr.bf16.mxu0 0
    %289 = vmatmul.mubr.bf16.gmra.mrb[0].mxu0 %v126
    %v290 = vpop.f32.mrb[0].mxu0
    %v291 = vadd.f32 0.0, %v290
    %v292 = vpop.f32.mrb[0].mxu0
    %v293 = vpop.f32.mrb[0].mxu0
    %v294 = vadd.f32 0.0, %v293
    %v295 = vpop.f32.mrb[0].mxu0
    %296 = vmatprep.mubr.bf16.mxu0 0
    %297 = vmatmul.mubr.bf16.gmra.mrb[0].mxu0 %v127
    %v298 = vpop.f32.mrb[0].mxu0
    %v299 = vadd.f32 0.0, %v298
    %v300 = vpop.f32.mrb[0].mxu0
    %v301 = vpop.f32.mrb[0].mxu0
    %v302 = vadd.f32 0.0, %v301
    %v303 = vpop.f32.mrb[0].mxu0
    %304 = vdwg.mxu0
    %v305 = vadd.f32 %v128, %v243
    %v306 = vadd.f32 %v129, %v246
    %v307 = vadd.f32 %v130, %v251
    %v308 = vadd.f32 %v131, %v254
    %v309 = vadd.f32 %v132, %v259
    %v310 = vadd.f32 %v133, %v262
    %v311 = vadd.f32 %v134, %v267
    %v312 = vadd.f32 %v135, %v270
    %v313 = vadd.f32 %v136, %v275
    %v314 = vadd.f32 %v137, %v278
    %v315 = vadd.f32 %v138, %v283
    %v316 = vadd.f32 %v139, %v286
    %v317 = vadd.f32 %v140, %v291
    %v318 = vadd.f32 %v141, %v294
    %v319 = vadd.f32 %v142, %v299
    %v320 = vadd.f32 %v143, %v302
    %321 = vst [vmem:[#allocation2] sm:$0xff] %v305
    %322 = vst [vmem:[#allocation2 + $0x8] sm:$0xff] %v306
    %323 = vst [vmem:[#allocation2 + $0x10] sm:$0xff] %v307
    %324 = vst [vmem:[#allocation2 + $0x18] sm:$0xff] %v308
    %325 = vst [vmem:[#allocation2 + $0x20] sm:$0xff] %v309
    %326 = vst [vmem:[#allocation2 + $0x28] sm:$0xff] %v310
    %327 = vst [vmem:[#allocation2 + $0x30] sm:$0xff] %v311
    %328 = vst [vmem:[#allocation2 + $0x38] sm:$0xff] %v312
    %329 = vst [vmem:[#allocation2 + $0x40] sm:$0xff] %v313
    %330 = vst [vmem:[#allocation2 + $0x48] sm:$0xff] %v314
    %331 = vst [vmem:[#allocation2 + $0x50] sm:$0xff] %v315
    %332 = vst [vmem:[#allocation2 + $0x58] sm:$0xff] %v316
    %333 = vst [vmem:[#allocation2 + $0x60] sm:$0xff] %v317
    %334 = vst [vmem:[#allocation2 + $0x68] sm:$0xff] %v318
    %335 = vst [vmem:[#allocation2 + $0x70] sm:$0xff] %v319
    %336 = vst [vmem:[#allocation2 + $0x78] sm:$0xff] %v320
    // Predicated region
    $region54: #{tpu_custom_call.1} parent=1 // pred_check
      %p337 = pneg %p96
    $region55: #{tpu_custom_call.1} parent=1 // pred_check_branch
      %339 = sbr.rel (%p337) target = $region57
    $region56: #{tpu_custom_call.1} parent=1 // pred_region
      %v340 = vld [vmem:[#allocation8] sm:$0xf]
      %v341 = vld [vmem:[#allocation8 + $0x4] sm:$0xf]
      %v342 = vld [vmem:[#allocation8 + $0x8] sm:$0xf]
      %v343 = vld [vmem:[#allocation8 + $0xc] sm:$0xf]
      %v344 = vld [vmem:[#allocation8 + $0x10] sm:$0xf]
      %v345 = vld [vmem:[#allocation8 + $0x14] sm:$0xf]
      %v346 = vld [vmem:[#allocation8 + $0x18] sm:$0xf]
      %v347 = vld [vmem:[#allocation8 + $0x1c] sm:$0xf]
      %v348 = vld [vmem:[#allocation8 + $0x20] sm:$0xf]
      %v349 = vld [vmem:[#allocation8 + $0x24] sm:$0xf]
      %v350 = vld [vmem:[#allocation8 + $0x28] sm:$0xf]
      %v351 = vld [vmem:[#allocation8 + $0x2c] sm:$0xf]
      %v352 = vld [vmem:[#allocation8 + $0x30] sm:$0xf]
      %v353 = vld [vmem:[#allocation8 + $0x34] sm:$0xf]
      %v354 = vld [vmem:[#allocation8 + $0x38] sm:$0xf]
      %v355 = vld [vmem:[#allocation8 + $0x3c] sm:$0xf]
      %v356 = vunpack.c.l.bf16 %v340
      %v357 = vunpack.c.l.bf16 %v341
      %v358 = vunpack.c.l.bf16 %v342
      %v359 = vunpack.c.l.bf16 %v343
      %v360 = vunpack.c.l.bf16 %v344
      %v361 = vunpack.c.l.bf16 %v345
      %v362 = vunpack.c.l.bf16 %v346
      %v363 = vunpack.c.l.bf16 %v347
      %v364 = vunpack.c.l.bf16 %v348
      %v365 = vunpack.c.l.bf16 %v349
      %v366 = vunpack.c.l.bf16 %v350
      %v367 = vunpack.c.l.bf16 %v351
      %v368 = vunpack.c.l.bf16 %v352
      %v369 = vunpack.c.l.bf16 %v353
      %v370 = vunpack.c.l.bf16 %v354
      %v371 = vunpack.c.l.bf16 %v355
      %v372 = vld [vmem:[#allocation2] sm:$0xff]
      %v373 = vld [vmem:[#allocation2 + $0x8] sm:$0xff]
      %v374 = vld [vmem:[#allocation2 + $0x10] sm:$0xff]
      %v375 = vld [vmem:[#allocation2 + $0x18] sm:$0xff]
      %v376 = vld [vmem:[#allocation2 + $0x20] sm:$0xff]
      %v377 = vld [vmem:[#allocation2 + $0x28] sm:$0xff]
      %v378 = vld [vmem:[#allocation2 + $0x30] sm:$0xff]
      %v379 = vld [vmem:[#allocation2 + $0x38] sm:$0xff]
      %v380 = vld [vmem:[#allocation2 + $0x40] sm:$0xff]
      %v381 = vld [vmem:[#allocation2 + $0x48] sm:$0xff]
      %v382 = vld [vmem:[#allocation2 + $0x50] sm:$0xff]
      %v383 = vld [vmem:[#allocation2 + $0x58] sm:$0xff]
      %v384 = vld [vmem:[#allocation2 + $0x60] sm:$0xff]
      %v385 = vld [vmem:[#allocation2 + $0x68] sm:$0xff]
      %v386 = vld [vmem:[#allocation2 + $0x70] sm:$0xff]
      %v387 = vld [vmem:[#allocation2 + $0x78] sm:$0xff]
      %v388 = vadd.f32 %v356, %v372
      %v389 = vadd.f32 %v357, %v373
      %v390 = vadd.f32 %v358, %v374
      %v391 = vadd.f32 %v359, %v375
      %v392 = vadd.f32 %v360, %v376
      %v393 = vadd.f32 %v361, %v377
      %v394 = vadd.f32 %v362, %v378
      %v395 = vadd.f32 %v363, %v379
      %v396 = vadd.f32 %v364, %v380
      %v397 = vadd.f32 %v365, %v381
      %v398 = vadd.f32 %v366, %v382
      %v399 = vadd.f32 %v367, %v383
      %v400 = vadd.f32 %v368, %v384
      %v401 = vadd.f32 %v369, %v385
      %v402 = vadd.f32 %v370, %v386
      %v403 = vadd.f32 %v371, %v387
      %v404 = vpack.c.bf16 %v389, %v388
      %v405 = vpack.c.bf16 %v391, %v390
      %v406 = vpack.c.bf16 %v393, %v392
      %v407 = vpack.c.bf16 %v395, %v394
      %v408 = vpack.c.bf16 %v397, %v396
      %v409 = vpack.c.bf16 %v399, %v398
      %v410 = vpack.c.bf16 %v401, %v400
      %v411 = vpack.c.bf16 %v403, %v402
      %v412 = vld [vmem:[#allocation9] sm:$0xf]
      %v413 = vld [vmem:[#allocation9 + $0x4] sm:$0xf]
      %v414 = vld [vmem:[#allocation9 + $0x8] sm:$0xf]
      %v415 = vld [vmem:[#allocation9 + $0xc] sm:$0xf]
      %v416 = vld [vmem:[#allocation9 + $0x10] sm:$0xf]
      %v417 = vld [vmem:[#allocation9 + $0x14] sm:$0xf]
      %v418 = vld [vmem:[#allocation9 + $0x18] sm:$0xf]
      %v419 = vld [vmem:[#allocation9 + $0x1c] sm:$0xf]
      %v420 = vld [vmem:[#allocation9 + $0x20] sm:$0xf]
      %v421 = vld [vmem:[#allocation9 + $0x24] sm:$0xf]
      %v422 = vld [vmem:[#allocation9 + $0x28] sm:$0xf]
      %v423 = vld [vmem:[#allocation9 + $0x2c] sm:$0xf]
      %v424 = vld [vmem:[#allocation9 + $0x30] sm:$0xf]
      %v425 = vld [vmem:[#allocation9 + $0x34] sm:$0xf]
      %v426 = vld [vmem:[#allocation9 + $0x38] sm:$0xf]
      %v427 = vld [vmem:[#allocation9 + $0x3c] sm:$0xf]
      %v428 = vld [vmem:[%s4] sm:$0x1]
      %v430 = vlaneseq
      %v431 = vshrl.u32 %v430, 7
      %v432 = vsub.s32 0, %v431
      %v433 = vrot.slane %v428, %v432
      %v451 = vunpack.c.l.b16 %v412
      %v452 = vunpack.c.l.b16 %v413
      %v453 = vunpack.c.l.b16 %v414
      %v454 = vunpack.c.l.b16 %v415
      %v455 = vunpack.c.l.b16 %v416
      %v456 = vunpack.c.l.b16 %v417
      %v457 = vunpack.c.l.b16 %v418
      %v458 = vunpack.c.l.b16 %v419
      %v459 = vunpack.c.l.b16 %v420
      %v460 = vunpack.c.l.b16 %v421
      %v461 = vunpack.c.l.b16 %v422
      %v462 = vunpack.c.l.b16 %v423
      %v463 = vunpack.c.l.b16 %v424
      %v464 = vunpack.c.l.b16 %v425
      %v465 = vunpack.c.l.b16 %v426
      %v466 = vunpack.c.l.b16 %v427
      %v467 = vpack.c.b16 %v452, %v451
      %v468 = vpack.c.b16 %v454, %v453
      %v469 = vpack.c.b16 %v456, %v455
      %v470 = vpack.c.b16 %v458, %v457
      %v471 = vpack.c.b16 %v460, %v459
      %v472 = vpack.c.b16 %v462, %v461
      %v473 = vpack.c.b16 %v464, %v463
      %v474 = vpack.c.b16 %v466, %v465
      %483 = vmatprep.subr.bf16.mxu0 0
      %484 = vmatpush1.bf16.msra.mxu0 %v467
      %485 = vmatprep.subr.bf16.mxu0 0
      %486 = vmatpush1.bf16.msra.mxu0 %v468
      %487 = vmatprep.subr.bf16.mxu0 0
      %488 = vmatpush1.bf16.msra.mxu0 %v469
      %489 = vmatprep.subr.bf16.mxu0 0
      %490 = vmatpush1.bf16.msra.mxu0 %v470
      %491 = vmatprep.subr.bf16.mxu0 0
      %492 = vmatpush1.bf16.msra.mxu0 %v471
      %493 = vmatprep.subr.bf16.mxu0 0
      %494 = vmatpush1.bf16.msra.mxu0 %v472
      %495 = vmatprep.subr.bf16.mxu0 0
      %496 = vmatpush1.bf16.msra.mxu0 %v473
      %497 = vmatprep.subr.bf16.mxu0 0
      %498 = vmatpush1.bf16.msra.mxu0 %v474
      %499 = vmatprep.subr.bf16.mxu0 0
      %500 = vmatpush1.bf16.msra.mxu0 0
      %501 = vmatprep.subr.bf16.mxu0 0
      %502 = vmatpush1.bf16.msra.mxu0 0
      %503 = vmatprep.subr.bf16.mxu0 0
      %504 = vmatpush1.bf16.msra.mxu0 0
      %505 = vmatprep.subr.bf16.mxu0 0
      %506 = vmatpush1.bf16.msra.mxu0 0
      %507 = vmatprep.subr.bf16.mxu0 0
      %508 = vmatpush1.bf16.msra.mxu0 0
      %509 = vmatprep.subr.bf16.mxu0 0
      %510 = vmatpush1.bf16.msra.mxu0 0
      %511 = vmatprep.subr.bf16.mxu0 0
      %512 = vmatpush1.bf16.msra.mxu0 0
      %513 = vmatprep.subr.bf16.mxu0 0
      %514 = vmatpush1.bf16.msra.mxu0 0
      %515 = vmatprep.mubr.bf16.mxu0 0
      %516 = vmatmul.mubr.bf16.gmra.mrb[0].mxu0 %v404
      %v517 = vpop.f32.mrb[0].mxu0
      %v518 = vadd.f32 %v433, %v517
      %v519 = vpop.f32.mrb[0].mxu0
      %v520 = vpop.f32.mrb[0].mxu0
      %v521 = vadd.f32 %v433, %v520
      %v522 = vpop.f32.mrb[0].mxu0
      %523 = vmatprep.mubr.bf16.mxu0 0
      %524 = vmatmul.mubr.bf16.gmra.mrb[0].mxu0 %v405
      %v525 = vpop.f32.mrb[0].mxu0
      %v526 = vadd.f32 %v433, %v525
      %v527 = vpop.f32.mrb[0].mxu0
      %v528 = vpop.f32.mrb[0].mxu0
      %v529 = vadd.f32 %v433, %v528
      %v530 = vpop.f32.mrb[0].mxu0
      %531 = vmatprep.mubr.bf16.mxu0 0
      %532 = vmatmul.mubr.bf16.gmra.mrb[0].mxu0 %v406
      %v533 = vpop.f32.mrb[0].mxu0
      %v534 = vadd.f32 %v433, %v533
      %v535 = vpop.f32.mrb[0].mxu0
      %v536 = vpop.f32.mrb[0].mxu0
      %v537 = vadd.f32 %v433, %v536
      %v538 = vpop.f32.mrb[0].mxu0
      %539 = vmatprep.mubr.bf16.mxu0 0
      %540 = vmatmul.mubr.bf16.gmra.mrb[0].mxu0 %v407
      %v541 = vpop.f32.mrb[0].mxu0
      %v542 = vadd.f32 %v433, %v541
      %v543 = vpop.f32.mrb[0].mxu0
      %v544 = vpop.f32.mrb[0].mxu0
      %v545 = vadd.f32 %v433, %v544
      %v546 = vpop.f32.mrb[0].mxu0
      %547 = vmatprep.mubr.bf16.mxu0 0
      %548 = vmatmul.mubr.bf16.gmra.mrb[0].mxu0 %v408
      %v549 = vpop.f32.mrb[0].mxu0
      %v550 = vadd.f32 %v433, %v549
      %v551 = vpop.f32.mrb[0].mxu0
      %v552 = vpop.f32.mrb[0].mxu0
      %v553 = vadd.f32 %v433, %v552
      %v554 = vpop.f32.mrb[0].mxu0
      %555 = vmatprep.mubr.bf16.mxu0 0
      %556 = vmatmul.mubr.bf16.gmra.mrb[0].mxu0 %v409
      %v557 = vpop.f32.mrb[0].mxu0
      %v558 = vadd.f32 %v433, %v557
      %v559 = vpop.f32.mrb[0].mxu0
      %v560 = vpop.f32.mrb[0].mxu0
      %v561 = vadd.f32 %v433, %v560
      %v562 = vpop.f32.mrb[0].mxu0
      %563 = vmatprep.mubr.bf16.mxu0 0
      %564 = vmatmul.mubr.bf16.gmra.mrb[0].mxu0 %v410
      %v565 = vpop.f32.mrb[0].mxu0
      %v566 = vadd.f32 %v433, %v565
      %v567 = vpop.f32.mrb[0].mxu0
      %v568 = vpop.f32.mrb[0].mxu0
      %v569 = vadd.f32 %v433, %v568
      %v570 = vpop.f32.mrb[0].mxu0
      %571 = vmatprep.mubr.bf16.mxu0 0
      %572 = vmatmul.mubr.bf16.gmra.mrb[0].mxu0 %v411
      %v573 = vpop.f32.mrb[0].mxu0
      %v574 = vadd.f32 %v433, %v573
      %v575 = vpop.f32.mrb[0].mxu0
      %v576 = vpop.f32.mrb[0].mxu0
      %v577 = vadd.f32 %v433, %v576
      %v578 = vpop.f32.mrb[0].mxu0
      %579 = vdwg.mxu0
      %vm580 = vcmp.gt.f32.partialorder %v518, 0.0
      %vm581 = vcmp.gt.f32.partialorder %v521, 0.0
      %vm582 = vcmp.gt.f32.partialorder %v526, 0.0
      %vm583 = vcmp.gt.f32.partialorder %v529, 0.0
      %vm584 = vcmp.gt.f32.partialorder %v534, 0.0
      %vm585 = vcmp.gt.f32.partialorder %v537, 0.0
      %vm586 = vcmp.gt.f32.partialorder %v542, 0.0
      %vm587 = vcmp.gt.f32.partialorder %v545, 0.0
      %vm588 = vcmp.gt.f32.partialorder %v550, 0.0
      %vm589 = vcmp.gt.f32.partialorder %v553, 0.0
      %vm590 = vcmp.gt.f32.partialorder %v558, 0.0
      %vm591 = vcmp.gt.f32.partialorder %v561, 0.0
      %vm592 = vcmp.gt.f32.partialorder %v566, 0.0
      %vm593 = vcmp.gt.f32.partialorder %v569, 0.0
      %vm594 = vcmp.gt.f32.partialorder %v574, 0.0
      %vm595 = vcmp.gt.f32.partialorder %v577, 0.0
      %v596 = vmul.f32 %v518, 0.01
      %v597 = vmul.f32 %v521, 0.01
      %v598 = vmul.f32 %v526, 0.01
      %v599 = vmul.f32 %v529, 0.01
      %v600 = vmul.f32 %v534, 0.01
      %v601 = vmul.f32 %v537, 0.01
      %v602 = vmul.f32 %v542, 0.01
      %v603 = vmul.f32 %v545, 0.01
      %v604 = vmul.f32 %v550, 0.01
      %v605 = vmul.f32 %v553, 0.01
      %v606 = vmul.f32 %v558, 0.01
      %v607 = vmul.f32 %v561, 0.01
      %v608 = vmul.f32 %v566, 0.01
      %v609 = vmul.f32 %v569, 0.01
      %v610 = vmul.f32 %v574, 0.01
      %v611 = vmul.f32 %v577, 0.01
      %v612 = vsel %vm580, %v518, %v596
      %v613 = vsel %vm581, %v521, %v597
      %v614 = vsel %vm582, %v526, %v598
      %v615 = vsel %vm583, %v529, %v599
      %v616 = vsel %vm584, %v534, %v600
      %v617 = vsel %vm585, %v537, %v601
      %v618 = vsel %vm586, %v542, %v602
      %v619 = vsel %vm587, %v545, %v603
      %v620 = vsel %vm588, %v550, %v604
      %v621 = vsel %vm589, %v553, %v605
      %v622 = vsel %vm590, %v558, %v606
      %v623 = vsel %vm591, %v561, %v607
      %v624 = vsel %vm592, %v566, %v608
      %v625 = vsel %vm593, %v569, %v609
      %v626 = vsel %vm594, %v574, %v610
      %v627 = vsel %vm595, %v577, %v611
      %v628 = vpack.c.bf16 %v613, %v612
      %v629 = vpack.c.bf16 %v615, %v614
      %v630 = vpack.c.bf16 %v617, %v616
      %v631 = vpack.c.bf16 %v619, %v618
      %v632 = vpack.c.bf16 %v621, %v620
      %v633 = vpack.c.bf16 %v623, %v622
      %v634 = vpack.c.bf16 %v625, %v624
      %v635 = vpack.c.bf16 %v627, %v626
      %v636 = vld [vmem:[#allocation11] sm:$0xf]
      %v637 = vld [vmem:[#allocation11 + $0x4] sm:$0xf]
      %v638 = vld [vmem:[#allocation11 + $0x8] sm:$0xf]
      %v639 = vld [vmem:[#allocation11 + $0xc] sm:$0xf]
      %v640 = vld [vmem:[#allocation11 + $0x10] sm:$0xf]
      %v641 = vld [vmem:[#allocation11 + $0x14] sm:$0xf]
      %v642 = vld [vmem:[#allocation11 + $0x18] sm:$0xf]
      %v643 = vld [vmem:[#allocation11 + $0x1c] sm:$0xf]
      %v644 = vld [vmem:[#allocation11 + $0x20] sm:$0xf]
      %v645 = vld [vmem:[#allocation11 + $0x24] sm:$0xf]
      %v646 = vld [vmem:[#allocation11 + $0x28] sm:$0xf]
      %v647 = vld [vmem:[#allocation11 + $0x2c] sm:$0xf]
      %v648 = vld [vmem:[#allocation11 + $0x30] sm:$0xf]
      %v649 = vld [vmem:[#allocation11 + $0x34] sm:$0xf]
      %v650 = vld [vmem:[#allocation11 + $0x38] sm:$0xf]
      %v651 = vld [vmem:[#allocation11 + $0x3c] sm:$0xf]
      %v652 = vld [vmem:[%s6] sm:$0x1]
      %v654 = vlaneseq
      %v655 = vshrl.u32 %v654, 7
      %v656 = vsub.s32 0, %v655
      %v657 = vrot.slane %v652, %v656
      %v675 = vunpack.c.l.b16 %v636
      %v676 = vunpack.c.l.b16 %v637
      %v677 = vunpack.c.l.b16 %v638
      %v678 = vunpack.c.l.b16 %v639
      %v679 = vunpack.c.l.b16 %v640
      %v680 = vunpack.c.l.b16 %v641
      %v681 = vunpack.c.l.b16 %v642
      %v682 = vunpack.c.l.b16 %v643
      %v683 = vunpack.c.l.b16 %v644
      %v684 = vunpack.c.l.b16 %v645
      %v685 = vunpack.c.l.b16 %v646
      %v686 = vunpack.c.l.b16 %v647
      %v687 = vunpack.c.l.b16 %v648
      %v688 = vunpack.c.l.b16 %v649
      %v689 = vunpack.c.l.b16 %v650
      %v690 = vunpack.c.l.b16 %v651
      %v691 = vpack.c.b16 %v676, %v675
      %v692 = vpack.c.b16 %v678, %v677
      %v693 = vpack.c.b16 %v680, %v679
      %v694 = vpack.c.b16 %v682, %v681
      %v695 = vpack.c.b16 %v684, %v683
      %v696 = vpack.c.b16 %v686, %v685
      %v697 = vpack.c.b16 %v688, %v687
      %v698 = vpack.c.b16 %v690, %v689
      %707 = vmatprep.subr.bf16.mxu0 0
      %708 = vmatpush1.bf16.msra.mxu0 %v691
      %709 = vmatprep.subr.bf16.mxu0 0
      %710 = vmatpush1.bf16.msra.mxu0 %v692
      %711 = vmatprep.subr.bf16.mxu0 0
      %712 = vmatpush1.bf16.msra.mxu0 %v693
      %713 = vmatprep.subr.bf16.mxu0 0
      %714 = vmatpush1.bf16.msra.mxu0 %v694
      %715 = vmatprep.subr.bf16.mxu0 0
      %716 = vmatpush1.bf16.msra.mxu0 %v695
      %717 = vmatprep.subr.bf16.mxu0 0
      %718 = vmatpush1.bf16.msra.mxu0 %v696
      %719 = vmatprep.subr.bf16.mxu0 0
      %720 = vmatpush1.bf16.msra.mxu0 %v697
      %721 = vmatprep.subr.bf16.mxu0 0
      %722 = vmatpush1.bf16.msra.mxu0 %v698
      %723 = vmatprep.subr.bf16.mxu0 0
      %724 = vmatpush1.bf16.msra.mxu0 0
      %725 = vmatprep.subr.bf16.mxu0 0
      %726 = vmatpush1.bf16.msra.mxu0 0
      %727 = vmatprep.subr.bf16.mxu0 0
      %728 = vmatpush1.bf16.msra.mxu0 0
      %729 = vmatprep.subr.bf16.mxu0 0
      %730 = vmatpush1.bf16.msra.mxu0 0
      %731 = vmatprep.subr.bf16.mxu0 0
      %732 = vmatpush1.bf16.msra.mxu0 0
      %733 = vmatprep.subr.bf16.mxu0 0
      %734 = vmatpush1.bf16.msra.mxu0 0
      %735 = vmatprep.subr.bf16.mxu0 0
      %736 = vmatpush1.bf16.msra.mxu0 0
      %737 = vmatprep.subr.bf16.mxu0 0
      %738 = vmatpush1.bf16.msra.mxu0 0
      %739 = vmatprep.mubr.bf16.mxu0 0
      %740 = vmatmul.mubr.bf16.gmra.mrb[0].mxu0 %v628
      %v741 = vpop.f32.mrb[0].mxu0
      %v742 = vadd.f32 %v657, %v741
      %v743 = vpop.f32.mrb[0].mxu0
      %v744 = vpop.f32.mrb[0].mxu0
      %v745 = vadd.f32 %v657, %v744
      %v746 = vpop.f32.mrb[0].mxu0
      %747 = vmatprep.mubr.bf16.mxu0 0
      %748 = vmatmul.mubr.bf16.gmra.mrb[0].mxu0 %v629
      %v749 = vpop.f32.mrb[0].mxu0
      %v750 = vadd.f32 %v657, %v749
      %v751 = vpop.f32.mrb[0].mxu0
      %v752 = vpop.f32.mrb[0].mxu0
      %v753 = vadd.f32 %v657, %v752
      %v754 = vpop.f32.mrb[0].mxu0
      %755 = vmatprep.mubr.bf16.mxu0 0
      %756 = vmatmul.mubr.bf16.gmra.mrb[0].mxu0 %v630
      %v757 = vpop.f32.mrb[0].mxu0
      %v758 = vadd.f32 %v657, %v757
      %v759 = vpop.f32.mrb[0].mxu0
      %v760 = vpop.f32.mrb[0].mxu0
      %v761 = vadd.f32 %v657, %v760
      %v762 = vpop.f32.mrb[0].mxu0
      %763 = vmatprep.mubr.bf16.mxu0 0
      %764 = vmatmul.mubr.bf16.gmra.mrb[0].mxu0 %v631
      %v765 = vpop.f32.mrb[0].mxu0
      %v766 = vadd.f32 %v657, %v765
      %v767 = vpop.f32.mrb[0].mxu0
      %v768 = vpop.f32.mrb[0].mxu0
      %v769 = vadd.f32 %v657, %v768
      %v770 = vpop.f32.mrb[0].mxu0
      %771 = vmatprep.mubr.bf16.mxu0 0
      %772 = vmatmul.mubr.bf16.gmra.mrb[0].mxu0 %v632
      %v773 = vpop.f32.mrb[0].mxu0
      %v774 = vadd.f32 %v657, %v773
      %v775 = vpop.f32.mrb[0].mxu0
      %v776 = vpop.f32.mrb[0].mxu0
      %v777 = vadd.f32 %v657, %v776
      %v778 = vpop.f32.mrb[0].mxu0
      %779 = vmatprep.mubr.bf16.mxu0 0
      %780 = vmatmul.mubr.bf16.gmra.mrb[0].mxu0 %v633
      %v781 = vpop.f32.mrb[0].mxu0
      %v782 = vadd.f32 %v657, %v781
      %v783 = vpop.f32.mrb[0].mxu0
      %v784 = vpop.f32.mrb[0].mxu0
      %v785 = vadd.f32 %v657, %v784
      %v786 = vpop.f32.mrb[0].mxu0
      %787 = vmatprep.mubr.bf16.mxu0 0
      %788 = vmatmul.mubr.bf16.gmra.mrb[0].mxu0 %v634
      %v789 = vpop.f32.mrb[0].mxu0
      %v790 = vadd.f32 %v657, %v789
      %v791 = vpop.f32.mrb[0].mxu0
      %v792 = vpop.f32.mrb[0].mxu0
      %v793 = vadd.f32 %v657, %v792
      %v794 = vpop.f32.mrb[0].mxu0
      %795 = vmatprep.mubr.bf16.mxu0 0
      %796 = vmatmul.mubr.bf16.gmra.mrb[0].mxu0 %v635
      %v797 = vpop.f32.mrb[0].mxu0
      %v798 = vadd.f32 %v657, %v797
      %v799 = vpop.f32.mrb[0].mxu0
      %v800 = vpop.f32.mrb[0].mxu0
      %v801 = vadd.f32 %v657, %v800
      %v802 = vpop.f32.mrb[0].mxu0
      %803 = vdwg.mxu0
      %vm804 = vcmp.gt.f32.partialorder %v742, 0.0
      %vm805 = vcmp.gt.f32.partialorder %v745, 0.0
      %vm806 = vcmp.gt.f32.partialorder %v750, 0.0
      %vm807 = vcmp.gt.f32.partialorder %v753, 0.0
      %vm808 = vcmp.gt.f32.partialorder %v758, 0.0
      %vm809 = vcmp.gt.f32.partialorder %v761, 0.0
      %vm810 = vcmp.gt.f32.partialorder %v766, 0.0
      %vm811 = vcmp.gt.f32.partialorder %v769, 0.0
      %vm812 = vcmp.gt.f32.partialorder %v774, 0.0
      %vm813 = vcmp.gt.f32.partialorder %v777, 0.0
      %vm814 = vcmp.gt.f32.partialorder %v782, 0.0
      %vm815 = vcmp.gt.f32.partialorder %v785, 0.0
      %vm816 = vcmp.gt.f32.partialorder %v790, 0.0
      %vm817 = vcmp.gt.f32.partialorder %v793, 0.0
      %vm818 = vcmp.gt.f32.partialorder %v798, 0.0
      %vm819 = vcmp.gt.f32.partialorder %v801, 0.0
      %v820 = vmul.f32 %v742, 0.01
      %v821 = vmul.f32 %v745, 0.01
      %v822 = vmul.f32 %v750, 0.01
      %v823 = vmul.f32 %v753, 0.01
      %v824 = vmul.f32 %v758, 0.01
      %v825 = vmul.f32 %v761, 0.01
      %v826 = vmul.f32 %v766, 0.01
      %v827 = vmul.f32 %v769, 0.01
      %v828 = vmul.f32 %v774, 0.01
      %v829 = vmul.f32 %v777, 0.01
      %v830 = vmul.f32 %v782, 0.01
      %v831 = vmul.f32 %v785, 0.01
      %v832 = vmul.f32 %v790, 0.01
      %v833 = vmul.f32 %v793, 0.01
      %v834 = vmul.f32 %v798, 0.01
      %v835 = vmul.f32 %v801, 0.01
      %v836 = vsel %vm804, %v742, %v820
      %v837 = vsel %vm805, %v745, %v821
      %v838 = vsel %vm806, %v750, %v822
      %v839 = vsel %vm807, %v753, %v823
      %v840 = vsel %vm808, %v758, %v824
      %v841 = vsel %vm809, %v761, %v825
      %v842 = vsel %vm810, %v766, %v826
      %v843 = vsel %vm811, %v769, %v827
      %v844 = vsel %vm812, %v774, %v828
      %v845 = vsel %vm813, %v777, %v829
      %v846 = vsel %vm814, %v782, %v830
      %v847 = vsel %vm815, %v785, %v831
      %v848 = vsel %vm816, %v790, %v832
      %v849 = vsel %vm817, %v793, %v833
      %v850 = vsel %vm818, %v798, %v834
      %v851 = vsel %vm819, %v801, %v835
      %v852 = vpack.c.bf16 %v837, %v836
      %v853 = vpack.c.bf16 %v839, %v838
      %v854 = vpack.c.bf16 %v841, %v840
      %v855 = vpack.c.bf16 %v843, %v842
      %v856 = vpack.c.bf16 %v845, %v844
      %v857 = vpack.c.bf16 %v847, %v846
      %v858 = vpack.c.bf16 %v849, %v848
      %v859 = vpack.c.bf16 %v851, %v850
      %v868 = vunpack.c.l.b16 %v852
      %v869 = vunpack.c.h.b16 %v852
      %v870 = vunpack.c.l.b16 %v853
      %v871 = vunpack.c.h.b16 %v853
      %v872 = vunpack.c.l.b16 %v854
      %v873 = vunpack.c.h.b16 %v854
      %v874 = vunpack.c.l.b16 %v855
      %v875 = vunpack.c.h.b16 %v855
      %v876 = vunpack.c.l.b16 %v856
      %v877 = vunpack.c.h.b16 %v856
      %v878 = vunpack.c.l.b16 %v857
      %v879 = vunpack.c.h.b16 %v857
      %v880 = vunpack.c.l.b16 %v858
      %v881 = vunpack.c.h.b16 %v858
      %v882 = vunpack.c.l.b16 %v859
      %v883 = vunpack.c.h.b16 %v859
      %v884 = vpack.c.b16 %v868, %v868
      %v885 = vpack.c.b16 %v869, %v869
      %v886 = vpack.c.b16 %v870, %v870
      %v887 = vpack.c.b16 %v871, %v871
      %v888 = vpack.c.b16 %v872, %v872
      %v889 = vpack.c.b16 %v873, %v873
      %v890 = vpack.c.b16 %v874, %v874
      %v891 = vpack.c.b16 %v875, %v875
      %v892 = vpack.c.b16 %v876, %v876
      %v893 = vpack.c.b16 %v877, %v877
      %v894 = vpack.c.b16 %v878, %v878
      %v895 = vpack.c.b16 %v879, %v879
      %v896 = vpack.c.b16 %v880, %v880
      %v897 = vpack.c.b16 %v881, %v881
      %v898 = vpack.c.b16 %v882, %v882
      %v899 = vpack.c.b16 %v883, %v883
      %916 = vst [vmem:[#allocation12] sm:$0xf] %v884
      %917 = vst [vmem:[#allocation12 + $0x4] sm:$0xf] %v885
      %918 = vst [vmem:[#allocation12 + $0x8] sm:$0xf] %v886
      %919 = vst [vmem:[#allocation12 + $0xc] sm:$0xf] %v887
      %920 = vst [vmem:[#allocation12 + $0x10] sm:$0xf] %v888
      %921 = vst [vmem:[#allocation12 + $0x14] sm:$0xf] %v889
      %922 = vst [vmem:[#allocation12 + $0x18] sm:$0xf] %v890
      %923 = vst [vmem:[#allocation12 + $0x1c] sm:$0xf] %v891
      %924 = vst [vmem:[#allocation12 + $0x20] sm:$0xf] %v892
      %925 = vst [vmem:[#allocation12 + $0x24] sm:$0xf] %v893
      %926 = vst [vmem:[#allocation12 + $0x28] sm:$0xf] %v894
      %927 = vst [vmem:[#allocation12 + $0x2c] sm:$0xf] %v895
      %928 = vst [vmem:[#allocation12 + $0x30] sm:$0xf] %v896
      %929 = vst [vmem:[#allocation12 + $0x34] sm:$0xf] %v897
      %930 = vst [vmem:[#allocation12 + $0x38] sm:$0xf] %v898
      %931 = vst [vmem:[#allocation12 + $0x3c] sm:$0xf] %v899
    $region57: #{tpu_custom_call.1} parent=1 // pred_fallthru
      _
    // Predicated region
    $region58: #{tpu_custom_call.1} parent=1 // pred_check
      _
    $region59: #{tpu_custom_call.1} parent=1 // pred_check_branch
      %933 = sbr.rel (0) target = $region61
    $region60: #{tpu_custom_call.1} parent=1 // pred_region
      %s935 = ssub.s32 1024, 1024
      %936 = vsyncadd [#allocation5], %s935
      %s937 = sshll.u32 [#allocation12], 4
      %s938 = int_to_ptr.vmem [resolvable:$true] %s937
      %943 = dma.vmem_to_hbm [thread:$0]  %s938, 1024, %s7, [#allocation5], 64, 64, 4
    $region61: #{tpu_custom_call.1} parent=1 // pred_fallthru
      _
    // Predicated region
    $region62: #{tpu_custom_call.1} parent=1 // pred_check
      _
    $region63: #{tpu_custom_call.1} parent=1 // pred_check_branch
      %945 = sbr.rel (0) target = $region65
    $region64: #{tpu_custom_call.1} parent=1 // pred_region
      %946 = dma.done [#allocation5], 1024
    $region65: #{tpu_custom_call.1} parent=1 // pred_fallthru
      _
    %947 = vsyncpa [#allocation4], 1
    %948 = vsyncpa [#allocation7], 1
    %949 = vsyncpa [#allocation10], 1
    %950 = vsyncpa [#allocation5], 1

</llo_original>
